<compile_context>
chip_gen: v6e
topology: v6e:2x2x1
jax: 0.10.0
libtpu: 0.0.40
codegen_flags: <defaults>
</compile_context>

<pallas_src>
import jax
import jax.numpy as jnp
from jax.experimental import pallas as pl
from jax.experimental.pallas import tpu as pltpu


# ---------------------------------------------------------------------------
# Pallas kernel
# ---------------------------------------------------------------------------
def wf_classifier_kernel(x_ref, w_ref, b_ref, out_ref):
    """out = x @ W^T + b, with W passed pre-transposed as (E, O)."""
    out_ref[...] = (
        jnp.dot(x_ref[...], w_ref[...], preferred_element_type=jnp.float32)
        + b_ref[...]
    ).astype(out_ref.dtype)


# ---------------------------------------------------------------------------
# Wrapper
# ---------------------------------------------------------------------------
def wf_classifier(x, weight, bias, *, batch_tile=1024):
    """x: (B, encoding_size); weight: (output_size, encoding_size); bias: (output_size,)."""
    x = jnp.asarray(x, jnp.float32)
    B, E = x.shape
    O, E2 = weight.shape
    assert E == E2, (E, E2)

    w_t = jnp.asarray(weight, jnp.float32).T           # (E, O) right-multiply layout
    b = jnp.asarray(bias, jnp.float32).reshape(1, O)   # (1, O) row vector

    if B > batch_tile:
        # Large-batch path: tile the batch axis, shard tiles across cores.
        return pl.pallas_call(
            wf_classifier_kernel,
            out_shape=jax.ShapeDtypeStruct((B, O), jnp.float32),
            grid_spec=pltpu.PrefetchScalarGridSpec(
                num_scalar_prefetch=0,
                grid=(pl.cdiv(B, batch_tile),),
                in_specs=[
                    pl.BlockSpec((batch_tile, E), lambda i: (i, 0)),
                    pl.BlockSpec((E, O), lambda i: (0, 0)),   # weight VMEM-resident
                    pl.BlockSpec((1, O), lambda i: (0, 0)),   # bias VMEM-resident
                ],
                out_specs=pl.BlockSpec((batch_tile, O), lambda i: (i, 0)),
            ),
            compiler_params=pltpu.CompilerParams(
                dimension_semantics=("parallel",)),
        )(x, w_t, b)

    # Small-shape path: whole arrays in VMEM, no grid (few-KB footprint).
    return pl.pallas_call(
        wf_classifier_kernel,
        out_shape=jax.ShapeDtypeStruct((B, O), jnp.float32),
        in_specs=[pl.BlockSpec(memory_space=pltpu.MemorySpace.VMEM)] * 3,
        out_specs=pl.BlockSpec(memory_space=pltpu.MemorySpace.VMEM),
    )(x, w_t, b)


# ---------------------------------------------------------------------------
# Pure-JAX reference (same math) for a correctness check
# ---------------------------------------------------------------------------
def reference_forward(x, weight, bias):
    return x @ weight.T + bias


if __name__ == "__main__":
    # Small shapes consistent with the module: batch=8, encoding=16, output=4.
    B, E, O = 8, 16, 4

    key = jax.random.PRNGKey(0)
    kx, kw, kb, kx2 = jax.random.split(key, 4)

    # Xavier-uniform weight init (like torch.nn.init.xavier_uniform_),
    # default PyTorch Linear bias init range for the bias.
    w_bound = (6.0 / (E + O)) ** 0.5
    b_bound = 1.0 / (E ** 0.5)
    weight = jax.random.uniform(kw, (O, E), jnp.float32, -w_bound, w_bound)
    bias = jax.random.uniform(kb, (O,), jnp.float32, -b_bound, b_bound)

    x = jax.random.normal(kx, (B, E), jnp.float32)

    # Small-batch (no-grid) path.
    out = jax.block_until_ready(wf_classifier(x, weight, bias))
    ref = reference_forward(x, weight, bias)
    assert out.shape == (B, O), out.shape
    assert jnp.allclose(out, ref, atol=1e-5, rtol=1e-5), (
        f"max abs err {jnp.max(jnp.abs(out - ref))}")

    # Batch-tiled (parallel grid) path, including a ragged trailing block
    # (600 rows with a 256-row tile -> 3 blocks, last one partial).
    B2 = 600
    x2 = jax.random.normal(kx2, (B2, E), jnp.float32)
    out2 = jax.block_until_ready(wf_classifier(x2, weight, bias, batch_tile=256))
    ref2 = reference_forward(x2, weight, bias)
    assert out2.shape == (B2, O), out2.shape
    assert jnp.allclose(out2, ref2, atol=1e-5, rtol=1e-5), (
        f"max abs err {jnp.max(jnp.abs(out2 - ref2))}")

    print("KERNEL_OK")
</pallas_src>

<mosaic_0001>
module attributes {stable_mosaic.version = 11 : i64} {
  func.func @wf_classifier_kernel(%arg0: memref<8x16xf32, #tpu.memory_space<vmem>>, %arg1: memref<16x4xf32, #tpu.memory_space<vmem>>, %arg2: memref<1x4xf32, #tpu.memory_space<vmem>>, %arg3: memref<8x4xf32, #tpu.memory_space<vmem>>) attributes {dimension_semantics = [], scalar_prefetch = 0 : i64, scratch_operands = 0 : i64, tpu.core_type = #tpu.core_type<tc>} {
    %c0 = arith.constant 0 : index
    %c0_0 = arith.constant 0 : index
    %0 = vector.load %arg0[%c0, %c0_0] : memref<8x16xf32, #tpu.memory_space<vmem>>, vector<8x16xf32>
    %c0_1 = arith.constant 0 : index
    %c0_2 = arith.constant 0 : index
    %1 = vector.load %arg1[%c0_1, %c0_2] : memref<16x4xf32, #tpu.memory_space<vmem>>, vector<16x4xf32>
    %cst = arith.constant dense<0.000000e+00> : vector<8x4xf32>
    %2 = tpu.matmul %0, %1, %cst {dimension_numbers = #tpu.dot_dimension_numbers<[1], [0], [0], [1], [0, 0, 1, 1], [], []>} : vector<8x16xf32>, vector<16x4xf32>, vector<8x4xf32> -> vector<8x4xf32>
    %c0_3 = arith.constant 0 : index
    %c0_4 = arith.constant 0 : index
    %3 = vector.load %arg2[%c0_3, %c0_4] : memref<1x4xf32, #tpu.memory_space<vmem>>, vector<1x4xf32>
    %4 = vector.broadcast %3 : vector<1x4xf32> to vector<8x4xf32>
    %5 = arith.addf %2, %4 : vector<8x4xf32>
    %c0_5 = arith.constant 0 : index
    %c0_6 = arith.constant 0 : index
    %6 = vector.load %arg3[%c0_5, %c0_6] : memref<8x4xf32, #tpu.memory_space<vmem>>, vector<8x4xf32>
    tpu.vector_store %arg3[%c0_5, %c0_6], %5 {strides = array<i32>} : memref<8x4xf32, #tpu.memory_space<vmem>>, vector<8x4xf32>,
    return
  }
}

</mosaic_0001>

<llo_original>
// kernel: tpu_custom_call.1
$region0: #{tpu_custom_call.1}
  #allocation0 [shape = 'u32[]', space=smem, size = 0x4, offset = 0x4, fixed_abs, tag = 'smem constant byte address 0x4 - core index']
  #allocation1 [shape = 'u32[144,128]{1,0:T(1,128)}', space=vmem, size = 0x12000, scoped, tag = 'internal scratch']
  %s0 = inlined_call_operand.vmem [shape: f32[8,16], index: 0, kind: input, shape index: {}]
  %s1 = inlined_call_operand.vmem [shape: f32[16,4], index: 1, kind: input, shape index: {}]
  %s2 = inlined_call_operand.vmem [shape: f32[1,4], index: 2, kind: input, shape index: {}]
  %s3 = inlined_call_operand.vmem [shape: f32[8,4], index: 3, kind: output, shape index: {}]
  %s4 = sld [smem:[#allocation0]]
  $region22: #{tpu_custom_call.1} parent=0
    _
  %s6 = ssub.s32 1, %s4
  %s7 = scalar_select 0, %s6, %s4
  // Predicated region
  $region2: #{tpu_custom_call.1} parent=0 // pred_check
    _
  $region3: #{tpu_custom_call.1} parent=0 // pred_check_branch
    %9 = sbr.rel (0) target = $region5
  $region4: #{tpu_custom_call.1} parent=0 // pred_region
    _
  $region5: #{tpu_custom_call.1} parent=0 // pred_fallthru
    _
  // Predicated region
  $region6: #{tpu_custom_call.1} parent=0 // pred_check
    _
  $region7: #{tpu_custom_call.1} parent=0 // pred_check_branch
    %11 = sbr.rel (0) target = $region9
  $region8: #{tpu_custom_call.1} parent=0 // pred_region
    _
  $region9: #{tpu_custom_call.1} parent=0 // pred_fallthru
    _
  // Predicated region
  $region10: #{tpu_custom_call.1} parent=0 // pred_check
    _
  $region11: #{tpu_custom_call.1} parent=0 // pred_check_branch
    %13 = sbr.rel (0) target = $region13
  $region12: #{tpu_custom_call.1} parent=0 // pred_region
    _
  $region13: #{tpu_custom_call.1} parent=0 // pred_fallthru
    _
  %v14 = vld [vmem:[%s0] sm:$0xff]
  %v15 = vld [vmem:[%s1] sm:$0xff]
  %v16 = vld [vmem:[%s1 + $0x8] sm:$0xff]
  %v17 = vld [vmem:[%s2] sm:$0x1]
  %v19 = vlaneseq
  %v20 = vshrl.u32 %v19, 7
  %v21 = vsub.s32 0, %v20
  %v22 = vrot.slane %v17, %v21
  %vm24 = vcmask 130048
  %v26 = vsel %vm24, %v14, 0
  %28 = vmatprep.subr.mxu0 0.0
  %29 = vmatpush1.msra.mxu0 0.0
  %30 = vmatprep.subr.mxu0 0.0
  %31 = vmatpush1.msra.mxu0 0.0
  %32 = vmatprep.subr.mxu0 0.0
  %33 = vmatpush1.msra.mxu0 0.0
  %34 = vmatprep.subr.mxu0 0.0
  %35 = vmatpush1.msra.mxu0 0.0
  %36 = vmatprep.subr.mxu0 0.0
  %37 = vmatpush1.msra.mxu0 0.0
  %38 = vmatprep.subr.mxu0 0.0
  %39 = vmatpush1.msra.mxu0 0.0
  %40 = vmatprep.subr.mxu0 0.0
  %41 = vmatpush1.msra.mxu0 0.0
  %42 = vmatprep.subr.mxu0 0.0
  %43 = vmatpush1.msra.mxu0 0.0
  %44 = vmatprep.subr.mxu0 0.0
  %45 = vmatpush1.msra.mxu0 0.0
  %46 = vmatprep.subr.mxu0 0.0
  %47 = vmatpush1.msra.mxu0 0.0
  %48 = vmatprep.subr.mxu0 0.0
  %49 = vmatpush1.msra.mxu0 0.0
  %50 = vmatprep.subr.mxu0 0.0
  %51 = vmatpush1.msra.mxu0 0.0
  %52 = vmatprep.subr.mxu0 0.0
  %53 = vmatpush1.msra.mxu0 0.0
  %54 = vmatprep.subr.mxu0 0.0
  %55 = vmatpush1.msra.mxu0 0.0
  %56 = vmatprep.subr.mxu0 0.0
  %57 = vmatpush1.msra.mxu0 %v16
  %58 = vmatprep.subr.mxu0 0.0
  %59 = vmatpush1.msra.mxu0 %v15
  %60 = vmatprep.subr.mxu0 0.0
  %61 = vmatpush2.msra.mxu0 0.0
  %62 = vmatprep.subr.mxu0 0.0
  %63 = vmatpush2.msra.mxu0 0.0
  %64 = vmatprep.subr.mxu0 0.0
  %65 = vmatpush2.msra.mxu0 0.0
  %66 = vmatprep.subr.mxu0 0.0
  %67 = vmatpush2.msra.mxu0 0.0
  %68 = vmatprep.subr.mxu0 0.0
  %69 = vmatpush2.msra.mxu0 0.0
  %70 = vmatprep.subr.mxu0 0.0
  %71 = vmatpush2.msra.mxu0 0.0
  %72 = vmatprep.subr.mxu0 0.0
  %73 = vmatpush2.msra.mxu0 0.0
  %74 = vmatprep.subr.mxu0 0.0
  %75 = vmatpush2.msra.mxu0 0.0
  %76 = vmatprep.subr.mxu0 0.0
  %77 = vmatpush2.msra.mxu0 0.0
  %78 = vmatprep.subr.mxu0 0.0
  %79 = vmatpush2.msra.mxu0 0.0
  %80 = vmatprep.subr.mxu0 0.0
  %81 = vmatpush2.msra.mxu0 0.0
  %82 = vmatprep.subr.mxu0 0.0
  %83 = vmatpush2.msra.mxu0 0.0
  %84 = vmatprep.subr.mxu0 0.0
  %85 = vmatpush2.msra.mxu0 0.0
  %86 = vmatprep.subr.mxu0 0.0
  %87 = vmatpush2.msra.mxu0 0.0
  %88 = vmatprep.subr.mxu0 0.0
  %89 = vmatpush2.msra.mxu0 0.0
  %90 = vmatprep.subr.mxu0 0.0
  %91 = vmatpush2.msra.mxu0 0.0
  %92 = vmatprep.mubr.f32.mxu0 0.0
  %93 = vmatmul.mubr.f32.gmra.mxu0 %v26
  %v94 = vpop.f32.mrf.mxu0
  %v95 = vadd.f32 %v22, %v94
  %v96 = vpop.f32.mrf.mxu0
  %97 = vdwg.mxu0
  %vm98 = vcmask 31744
  %99 = vst.msk [vmem:[%s3] sm:$0xff] %vm98, %v95
  // Predicated region
  $region14: #{tpu_custom_call.1} parent=0 // pred_check
    _
  $region15: #{tpu_custom_call.1} parent=0 // pred_check_branch
    %101 = sbr.rel (0) target = $region17
  $region16: #{tpu_custom_call.1} parent=0 // pred_region
    _
  $region17: #{tpu_custom_call.1} parent=0 // pred_fallthru
    _
  // Predicated region
  $region18: #{tpu_custom_call.1} parent=0 // pred_check
    _
  $region19: #{tpu_custom_call.1} parent=0 // pred_check_branch
    %103 = sbr.rel (0) target = $region21
  $region20: #{tpu_custom_call.1} parent=0 // pred_region
    _
  $region21: #{tpu_custom_call.1} parent=0 // pred_fallthru
    _

</llo_original>
